<compile_context>
chip_gen: v7x
topology: tpu7x:2x2x1
jax: 0.10.0
libtpu: 0.0.40
codegen_flags: <defaults>
</compile_context>

<pallas_src>
import functools

import jax
import jax.numpy as jnp
from jax.experimental import pallas as pl
from jax.experimental.pallas import tpu as pltpu


def _round_up(x, m):
    return ((x + m - 1) // m) * m


def _shape_layer_kernel(params_ref, comps_ref, mean_ref, out_ref):
    # out = params @ comps + mean  (mean broadcast over the batch tile).
    acc = jnp.dot(
        params_ref[...], comps_ref[...],
        preferred_element_type=jnp.float32,
    )
    out_ref[...] = (acc + mean_ref[...]).astype(out_ref.dtype)


def make_shape_layer(shape_mean, shape_components,
                     *, tn_cap=4096, tb_cap=256):
    """Build the forward fn; pads constant weights once (like buffer init).

    shape_mean       : (P, D) float32
    shape_components : (C, P, D) float32
    returns forward(shape_params) with shape_params (B, C) or (B, C, 1, 1),
    producing (B, P, D) float32.
    """
    C, P, D = shape_components.shape
    N = P * D
    N_pad = _round_up(N, 128)

    comps2d = shape_components.reshape(C, N).astype(jnp.float32)
    mean2d = shape_mean.reshape(1, N).astype(jnp.float32)
    if N_pad != N:  # done once at init, not per call
        comps2d = jnp.pad(comps2d, ((0, 0), (0, N_pad - N)))
        mean2d = jnp.pad(mean2d, ((0, 0), (0, N_pad - N)))

    def forward(shape_params):
        B = shape_params.shape[0]
        params2d = shape_params.reshape(B, C).astype(jnp.float32)

        # Pad only to sublane granularity (tiny copy: B_pad x C floats).
        B_pad = _round_up(B, 8)
        if B_pad != B:
            params2d = jnp.pad(params2d, ((0, B_pad - B), (0, 0)))

        TB = min(tb_cap, B_pad)
        TN = min(tn_cap, N_pad)
        # v7x: if there is only one batch tile, split N into >= 2 tiles so the
        # second TensorCore has work (harmless on v5e/v6e).
        if B_pad <= TB and TN >= N_pad and N_pad >= 2 * 128:
            TN = _round_up(pl.cdiv(N_pad, 2), 128)

        grid = (pl.cdiv(N_pad, TN), pl.cdiv(B_pad, TB))  # batch innermost

        out2d = pl.pallas_call(
            _shape_layer_kernel,
            out_shape=jax.ShapeDtypeStruct((B_pad, N_pad), jnp.float32),
            grid=grid,
            in_specs=[
                # params tile: varies with (inner) batch tile only.
                pl.BlockSpec((TB, C), lambda j, i: (i, 0)),
                # components tile: varies with (outer) lane tile only ->
                # resident in VMEM across the inner batch loop.
                pl.BlockSpec((C, TN), lambda j, i: (0, j)),
                # mean tile: same residency as components.
                pl.BlockSpec((1, TN), lambda j, i: (0, j)),
            ],
            out_specs=pl.BlockSpec((TB, TN), lambda j, i: (i, j)),
            compiler_params=pltpu.CompilerParams(
                dimension_semantics=("parallel", "parallel")),
            cost_estimate=pl.CostEstimate(
                flops=2 * B_pad * C * N_pad + B_pad * N_pad,
                transcendentals=0,
                bytes_accessed=4 * (B_pad * C + C * N_pad + N_pad
                                    + B_pad * N_pad)),
        )(params2d, comps2d, mean2d)

        # Slice off padding and restore (B, P, D).
        return out2d[:B, :N].reshape(B, P, D)

    return forward


def _reference(shape_params, shape_mean, shape_components):
    # Pure-JAX reference mirroring the PyTorch _ShapeLayerPy forward.
    B = shape_params.shape[0]
    C, P, D = shape_components.shape
    params = shape_params.reshape(B, C, 1, 1)
    comps = jnp.broadcast_to(shape_components[None], (B, C, P, D))
    weighted = comps * jnp.broadcast_to(params, (B, C, P, D))
    return shape_mean[None] + weighted.sum(axis=1)


if __name__ == "__main__":
    key = jax.random.PRNGKey(0)
    k1, k2 = jax.random.split(key)

    # "shapes" array as in __init__: (1 + num_components, num_points, dim)
    C = 4    # number of eigen-shape components
    P = 16   # number of landmark points
    D = 2    # point dimensionality
    B = 2    # batch size

    shapes_arr = jax.random.normal(k1, (1 + C, P, D), dtype=jnp.float32)
    shape_mean = shapes_arr[0]            # (P, D)
    shape_components = shapes_arr[1:]     # (C, P, D)

    # shape parameters, PyTorch-style (B, C, 1, 1)
    shape_params = jax.random.normal(k2, (B, C, 1, 1), dtype=jnp.float32)

    forward = make_shape_layer(shape_mean, shape_components)
    out = forward(shape_params)
    out = jax.block_until_ready(out)

    ref = _reference(shape_params, shape_mean, shape_components)
    assert out.shape == (B, P, D), out.shape
    assert jnp.allclose(out, ref, atol=1e-5, rtol=1e-5), "mismatch vs reference"

    print("KERNEL_OK")
</pallas_src>

<mosaic_0001>
module attributes {stable_mosaic.version = 11 : i64} {
  func.func @_shape_layer_kernel(%arg0: i32, %arg1: i32, %arg2: memref<8x4xf32, #tpu.memory_space<vmem>>, %arg3: memref<4x128xf32, #tpu.memory_space<vmem>>, %arg4: memref<1x128xf32, #tpu.memory_space<vmem>>, %arg5: memref<8x128xf32, #tpu.memory_space<vmem>>) attributes {dimension_semantics = [#tpu.dimension_semantics<parallel>, #tpu.dimension_semantics<parallel>], iteration_bounds = array<i64: 1, 1>, scalar_prefetch = 0 : i64, scratch_operands = 0 : i64, tpu.core_type = #tpu.core_type<tc>, window_params = [{transform_indices = @transform_0, window_bounds = array<i64: 8, 4>}, {transform_indices = @transform_1, window_bounds = array<i64: 4, 128>}, {transform_indices = @transform_2, window_bounds = array<i64: 1, 128>}, {transform_indices = @transform_3, window_bounds = array<i64: 8, 128>}]} {
    %c0 = arith.constant 0 : index
    %c0_0 = arith.constant 0 : index
    %0 = vector.load %arg2[%c0, %c0_0] : memref<8x4xf32, #tpu.memory_space<vmem>>, vector<8x4xf32>
    %c0_1 = arith.constant 0 : index
    %c0_2 = arith.constant 0 : index
    %1 = vector.load %arg3[%c0_1, %c0_2] : memref<4x128xf32, #tpu.memory_space<vmem>>, vector<4x128xf32>
    %cst = arith.constant dense<0.000000e+00> : vector<8x128xf32>
    %2 = tpu.matmul %0, %1, %cst {dimension_numbers = #tpu.dot_dimension_numbers<[1], [0], [0], [1], [0, 0, 1, 1], [], []>} : vector<8x4xf32>, vector<4x128xf32>, vector<8x128xf32> -> vector<8x128xf32>
    %c0_3 = arith.constant 0 : index
    %c0_4 = arith.constant 0 : index
    %3 = vector.load %arg4[%c0_3, %c0_4] : memref<1x128xf32, #tpu.memory_space<vmem>>, vector<1x128xf32>
    %4 = vector.broadcast %3 : vector<1x128xf32> to vector<8x128xf32>
    %5 = arith.addf %2, %4 : vector<8x128xf32>
    %c0_5 = arith.constant 0 : index
    %c0_6 = arith.constant 0 : index
    %6 = vector.load %arg5[%c0_5, %c0_6] : memref<8x128xf32, #tpu.memory_space<vmem>>, vector<8x128xf32>
    tpu.vector_store %arg5[%c0_5, %c0_6], %5 {strides = array<i32>} : memref<8x128xf32, #tpu.memory_space<vmem>>, vector<8x128xf32>,
    return
  }
  func.func @transform_0(%arg0: i32, %arg1: i32) -> (i32, i32) {
    %c0_i32 = arith.constant 0 : i32
    %c0_i32_0 = arith.constant 0 : i32
    return %arg1, %c0_i32 : i32, i32
  }
  func.func @transform_1(%arg0: i32, %arg1: i32) -> (i32, i32) {
    %c0_i32 = arith.constant 0 : i32
    %c0_i32_0 = arith.constant 0 : i32
    return %c0_i32, %arg0 : i32, i32
  }
  func.func @transform_2(%arg0: i32, %arg1: i32) -> (i32, i32) {
    %c0_i32 = arith.constant 0 : i32
    %c0_i32_0 = arith.constant 0 : i32
    return %c0_i32, %arg0 : i32, i32
  }
  func.func @transform_3(%arg0: i32, %arg1: i32) -> (i32, i32) {
    %c0_i32 = arith.constant 0 : i32
    return %arg1, %arg0 : i32, i32
  }
}

</mosaic_0001>

<llo_original>
// kernel: tpu_custom_call.1
$region0: #{tpu_custom_call.1}
  #allocation0 [shape = 'u32[]', space=smem, size = 0x4, offset = 0x4, fixed_abs, tag = 'smem constant byte address 0x4 - core index']
  #allocation1 [shape = 'u32[144,128]{1,0:T(1,128)}', space=vmem, size = 0x12000, scoped, tag = 'internal scratch']
  %s0 = inlined_call_operand.vmem [shape: f32[8,4], index: 0, kind: input, shape index: {}]
  %s1 = inlined_call_operand.vmem [shape: f32[4,128], index: 1, kind: input, shape index: {}]
  %s2 = inlined_call_operand.vmem [shape: f32[1,128], index: 2, kind: input, shape index: {}]
  %s3 = inlined_call_operand.hbm [shape: f32[8,128], index: 3, kind: output, shape index: {}]
  %s4 = sld [smem:[#allocation0]]
  $region22: #{tpu_custom_call.1} parent=0
    _
  %s6 = ssub.s32 1, %s4
  %s7 = scalar_select 0, %s6, %s4
  $region1: #{tpu_custom_call.1} parent=0
    #allocation2 [shape = 'u8[4096]{0}', space=vmem, size = 0x1000, scoped, tag = 'output window, operand 0, single buffered']
    #allocation3 [shape = 's32[1]{0}', space=sflag, size = 0x4, scoped, tag = 'scoped memory for tpu_custom_call.1']
    %8 = vsyncpa [#allocation3], 0
    // Predicated region
    $region2: #{tpu_custom_call.1} parent=1 // pred_check
      _
    $region3: #{tpu_custom_call.1} parent=1 // pred_check_branch
      %10 = sbr.rel (0) target = $region5
    $region4: #{tpu_custom_call.1} parent=1 // pred_region
      _
    $region5: #{tpu_custom_call.1} parent=1 // pred_fallthru
      _
    // Predicated region
    $region6: #{tpu_custom_call.1} parent=1 // pred_check
      _
    $region7: #{tpu_custom_call.1} parent=1 // pred_check_branch
      %12 = sbr.rel (0) target = $region9
    $region8: #{tpu_custom_call.1} parent=1 // pred_region
      _
    $region9: #{tpu_custom_call.1} parent=1 // pred_fallthru
      _
    // Predicated region
    $region10: #{tpu_custom_call.1} parent=1 // pred_check
      _
    $region11: #{tpu_custom_call.1} parent=1 // pred_check_branch
      %14 = sbr.rel (0) target = $region13
    $region12: #{tpu_custom_call.1} parent=1 // pred_region
      _
    $region13: #{tpu_custom_call.1} parent=1 // pred_fallthru
      _
    %v15 = vld [vmem:[%s0] sm:$0xff]
    %v16 = vld [vmem:[%s1] sm:$0xf]
    %v17 = vld [vmem:[%s2] sm:$0x1]
    %v19 = vlaneseq
    %v20 = vshrl.u32 %v19, 7
    %v21 = vsub.s32 0, %v20
    %v22 = vrot.slane %v17, %v21
    %vm24 = vcmask 31744
    %v26 = vsel %vm24, %v15, 0
    %vm28 = vcmask 1043456
    %v30 = vsel %vm28, %v16, 0
    %32 = vmatprep.subr.mxu0 0.0
    %33 = vmatpush1.msra.mxu0 %v30
    %34 = vmatprep.subr.mxu0 0.0
    %35 = vmatpush1.msra.mxu0 0.0
    %36 = vmatprep.subr.mxu0 0.0
    %37 = vmatpush1.msra.mxu0 0.0
    %38 = vmatprep.subr.mxu0 0.0
    %39 = vmatpush1.msra.mxu0 0.0
    %40 = vmatprep.subr.mxu0 0.0
    %41 = vmatpush1.msra.mxu0 0.0
    %42 = vmatprep.subr.mxu0 0.0
    %43 = vmatpush1.msra.mxu0 0.0
    %44 = vmatprep.subr.mxu0 0.0
    %45 = vmatpush1.msra.mxu0 0.0
    %46 = vmatprep.subr.mxu0 0.0
    %47 = vmatpush1.msra.mxu0 0.0
    %48 = vmatprep.subr.mxu0 0.0
    %49 = vmatpush1.msra.mxu0 0.0
    %50 = vmatprep.subr.mxu0 0.0
    %51 = vmatpush1.msra.mxu0 0.0
    %52 = vmatprep.subr.mxu0 0.0
    %53 = vmatpush1.msra.mxu0 0.0
    %54 = vmatprep.subr.mxu0 0.0
    %55 = vmatpush1.msra.mxu0 0.0
    %56 = vmatprep.subr.mxu0 0.0
    %57 = vmatpush1.msra.mxu0 0.0
    %58 = vmatprep.subr.mxu0 0.0
    %59 = vmatpush1.msra.mxu0 0.0
    %60 = vmatprep.subr.mxu0 0.0
    %61 = vmatpush1.msra.mxu0 0.0
    %62 = vmatprep.subr.mxu0 0.0
    %63 = vmatpush1.msra.mxu0 0.0
    %64 = vmatprep.subr.mxu0 0.0
    %65 = vmatpush1.msra.mxu0 0.0
    %66 = vmatprep.subr.mxu0 0.0
    %67 = vmatpush1.msra.mxu0 0.0
    %68 = vmatprep.subr.mxu0 0.0
    %69 = vmatpush1.msra.mxu0 0.0
    %70 = vmatprep.subr.mxu0 0.0
    %71 = vmatpush1.msra.mxu0 0.0
    %72 = vmatprep.subr.mxu0 0.0
    %73 = vmatpush1.msra.mxu0 0.0
    %74 = vmatprep.subr.mxu0 0.0
    %75 = vmatpush1.msra.mxu0 0.0
    %76 = vmatprep.subr.mxu0 0.0
    %77 = vmatpush1.msra.mxu0 0.0
    %78 = vmatprep.subr.mxu0 0.0
    %79 = vmatpush1.msra.mxu0 0.0
    %80 = vmatprep.subr.mxu0 0.0
    %81 = vmatpush1.msra.mxu0 0.0
    %82 = vmatprep.subr.mxu0 0.0
    %83 = vmatpush1.msra.mxu0 0.0
    %84 = vmatprep.subr.mxu0 0.0
    %85 = vmatpush1.msra.mxu0 0.0
    %86 = vmatprep.subr.mxu0 0.0
    %87 = vmatpush1.msra.mxu0 0.0
    %88 = vmatprep.subr.mxu0 0.0
    %89 = vmatpush1.msra.mxu0 0.0
    %90 = vmatprep.subr.mxu0 0.0
    %91 = vmatpush1.msra.mxu0 0.0
    %92 = vmatprep.subr.mxu0 0.0
    %93 = vmatpush1.msra.mxu0 0.0
    %94 = vmatprep.subr.mxu0 0.0
    %95 = vmatpush1.msra.mxu0 0.0
    %96 = vmatprep.mubr.f32.mxu0 0.0
    %97 = vmatmul.mubr.f32.gmra.mrb[0].mxu0 %v26
    %v98 = vpop.f32.mrb[0].mxu0
    %v99 = vadd.f32 %v22, %v98
    %v100 = vpop.f32.mrb[0].mxu0
    %101 = vdwg.mxu0
    %102 = vst [vmem:[#allocation2] sm:$0xff] %v99
    // Predicated region
    $region14: #{tpu_custom_call.1} parent=1 // pred_check
      _
    $region15: #{tpu_custom_call.1} parent=1 // pred_check_branch
      %104 = sbr.rel (0) target = $region17
    $region16: #{tpu_custom_call.1} parent=1 // pred_region
      %s106 = ssub.s32 128, 128
      %107 = vsyncadd [#allocation3], %s106
      %s109 = sshll.u32 [#allocation2], 4
      %s110 = int_to_ptr.vmem [resolvable:$true] %s109
      %112 = dma.vmem_to_hbm [thread:$0]  %s110, 128, %s3, [#allocation3]
    $region17: #{tpu_custom_call.1} parent=1 // pred_fallthru
      _
    // Predicated region
    $region18: #{tpu_custom_call.1} parent=1 // pred_check
      _
    $region19: #{tpu_custom_call.1} parent=1 // pred_check_branch
      %114 = sbr.rel (0) target = $region21
    $region20: #{tpu_custom_call.1} parent=1 // pred_region
      %115 = dma.done [#allocation3], 128
    $region21: #{tpu_custom_call.1} parent=1 // pred_fallthru
      _
    %116 = vsyncpa [#allocation3], 1

</llo_original>
